<compile_context>
chip_gen: v7x
topology: tpu7x:2x2x1
jax: 0.10.0
libtpu: 0.0.40
codegen_flags: <defaults>
</compile_context>

<pallas_src>
import jax
import jax.numpy as jnp
from jax.experimental import pallas as pl
from jax.experimental.pallas import tpu as pltpu

# ----- model hyperparameters (small, consistent with the module) -----
B = 2                       # real batch
BP = 8                      # batch padded to the f32 sublane tile
NC = 3                      # image channels
HW = 16                     # spatial size (16x16)
D_IN = NC * HW * HW         # 768 flattened input dim
HID = 128                   # hidden width of encoder/decoder MLPs
Z_DIM = 8                   # latent dim (2*Z_DIM = encoder output width)
NUM_SLOTS = 4
SLOT_DIM = 4                # num_slots * slot_dim == 2 * z_dim
assert NUM_SLOTS * SLOT_DIM == 2 * Z_DIM
assert D_IN % HID == 0
N_OUT_CHUNKS = D_IN // HID  # 6

# ----- layout of the packed small-operand carrier: (PACK_ROWS, HID) f32 -----
ROW_W2T = 0                          # rows [0, 16)  : w2^T  (2*Z_DIM, HID)
ROW_W3 = ROW_W2T + 2 * Z_DIM         # rows [16, 24) : w3    (Z_DIM, HID)
ROW_B1 = ROW_W3 + Z_DIM              # row 24        : b1    (HID,)
ROW_B2 = ROW_B1 + 1                  # row 25        : b2 in lanes [0, 2*Z_DIM)
ROW_B3 = ROW_B2 + 1                  # row 26        : b3    (HID,)
ROW_B4 = ROW_B3 + 1                  # rows [27, 33) : b4 reshaped (6, HID)
ROW_EPS = ROW_B4 + N_OUT_CHUNKS      # rows [33, 41) : eps (BP, Z_DIM) in lanes [0, Z_DIM)
PACK_ROWS = 48                       # 41 rows padded up to a multiple of 8
assert ROW_EPS + BP <= PACK_ROWS


def _beta_vae_kernel(x_ref, w1_ref, w4_ref, pack_ref, zh_ref, xr_ref):
    # ---- encoder layer 1: (BP, D_IN) bf16 @ (D_IN, HID) bf16 -> f32 ----
    b1 = pack_ref[ROW_B1:ROW_B1 + 1, :]                              # (1, HID)
    h = jnp.dot(x_ref[...], w1_ref[...],
                preferred_element_type=jnp.float32) + b1
    h = jnp.maximum(h, 0.0)

    # ---- encoder layer 2: w2 carried transposed (2*Z_DIM, HID), contract on
    #      dim 1 of both operands (lane-dense carry, no lane-padded DMA) ----
    w2t = pack_ref[ROW_W2T:ROW_W2T + 2 * Z_DIM, :]                   # (2Z, HID)
    b2 = pack_ref[ROW_B2:ROW_B2 + 1, :2 * Z_DIM]                     # (1, 2Z)
    zh = jax.lax.dot_general(h, w2t, (((1,), (1,)), ((), ())),
                             preferred_element_type=jnp.float32) + b2  # (BP, 2Z)

    # Lane-dense (BP, HID) output slab; real zh occupies lanes [0, 2*Z_DIM).
    zh_ref[...] = jnp.zeros_like(zh_ref)
    zh_ref[:, :2 * Z_DIM] = zh

    # ---- reparameterize ----
    mu = zh[:, :Z_DIM]
    logvar = zh[:, Z_DIM:]
    eps = pack_ref[ROW_EPS:ROW_EPS + BP, :Z_DIM]                      # (BP, Z)
    z = mu + jnp.exp(logvar * 0.5) * eps                              # (BP, Z)

    # ---- decoder layer 1 on the VPU (K = Z_DIM = 8 broadcast MACs) ----
    h2 = jnp.broadcast_to(pack_ref[ROW_B3:ROW_B3 + 1, :], (BP, HID))
    for k in range(Z_DIM):
        h2 = h2 + z[:, k:k + 1] * pack_ref[ROW_W3 + k:ROW_W3 + k + 1, :]
    h2 = jnp.maximum(h2, 0.0)

    # ---- decoder layer 2: (BP, HID) bf16 @ (HID, D_IN) bf16 -> f32 ----
    xr = jnp.dot(h2.astype(jnp.bfloat16), w4_ref[...],
                 preferred_element_type=jnp.float32)                  # (BP, D_IN)
    # Bias add + store per 128-lane chunk (all stores unmasked, lane-aligned).
    for j in range(N_OUT_CHUNKS):
        sl = slice(j * HID, (j + 1) * HID)
        xr_ref[:, sl] = xr[:, sl] + pack_ref[ROW_B4 + j:ROW_B4 + j + 1, :]


@jax.jit
def beta_vae_forward(x, eps, w1, w4, pack):
    """x: (B, NC, HW, HW) f32, eps: (B, Z_DIM) f32, w1/w4 bf16, pack (48,128) f32."""
    b0 = x.shape[0]
    assert b0 <= BP

    # Flatten, cast to bf16 (fused with the pad) and zero-pad the batch to BP.
    x_flat = x.reshape(b0, -1).astype(jnp.bfloat16)                   # (B, D_IN)
    x_pad = jnp.pad(x_flat, ((0, BP - b0), (0, 0)))                   # (BP, D_IN)
    eps_pad = jnp.pad(eps, ((0, BP - b0), (0, 0)))                    # (BP, Z_DIM)
    # Insert per-call eps into the static parameter pack (one carrier DMA).
    pack_call = pack.at[ROW_EPS:ROW_EPS + BP, :Z_DIM].set(eps_pad)

    vmem = pl.BlockSpec(memory_space=pltpu.MemorySpace.VMEM)
    zh_p, xr_p = pl.pallas_call(
        _beta_vae_kernel,
        out_shape=(
            jax.ShapeDtypeStruct((BP, HID), jnp.float32),   # lane-dense zh slab
            jax.ShapeDtypeStruct((BP, D_IN), jnp.float32),  # x_recon (flat)
        ),
        in_specs=[vmem] * 4,
        out_specs=(vmem, vmem),
    )(x_pad, w1, w4, pack_call)

    # Slice padding / lane padding off outside the kernel.
    zh = zh_p[:b0, :2 * Z_DIM]
    mu = zh[:, :Z_DIM]
    logvar = zh[:, Z_DIM:]
    x_recon = xr_p[:b0].reshape(x.shape)
    zh_slots = zh.reshape(b0, NUM_SLOTS, SLOT_DIM)
    return zh_slots, x_recon, mu, logvar


# ----------------------------- parameters ---------------------------------

def kaiming_weight(key, fan_in, fan_out, dtype=jnp.float32):
    """kaiming_normal_ (fan_in mode, gain=sqrt(2)), stored as (in, out)."""
    std = jnp.sqrt(2.0 / fan_in)
    w = jax.random.normal(key, (fan_in, fan_out), dtype=jnp.float32) * std
    return w.astype(dtype)


def init_params(key, *, bias_scale=0.0):
    """Returns raw params (w1, w2, w3, w4, b1, b2, b3, b4).

    bias_scale=0.0 matches kaiming_init() (zero biases); non-zero values are
    used in the test to exercise the bias packing paths.
    """
    ks = jax.random.split(key, 8)
    w1 = kaiming_weight(ks[0], D_IN, HID, jnp.bfloat16)     # encoder layer 1
    w2 = kaiming_weight(ks[1], HID, 2 * Z_DIM)              # encoder layer 2 -> zh
    w3 = kaiming_weight(ks[2], Z_DIM, HID)                  # decoder layer 1
    w4 = kaiming_weight(ks[3], HID, D_IN, jnp.bfloat16)     # decoder layer 2 -> recon

    def bias(k, n):
        if bias_scale == 0.0:
            return jnp.zeros((n,), jnp.float32)
        return bias_scale * jax.random.normal(k, (n,), jnp.float32)

    b1 = bias(ks[4], HID)
    b2 = bias(ks[5], 2 * Z_DIM)
    b3 = bias(ks[6], HID)
    b4 = bias(ks[7], D_IN)
    return (w1, w2, w3, w4, b1, b2, b3, b4)


def pack_small_params(w2, w3, b1, b2, b3, b4):
    """Pack all sub-vreg operands into one lane-dense (PACK_ROWS, HID) carrier."""
    pack = jnp.zeros((PACK_ROWS, HID), dtype=jnp.float32)
    pack = pack.at[ROW_W2T:ROW_W2T + 2 * Z_DIM, :].set(w2.T)          # (2Z, HID)
    pack = pack.at[ROW_W3:ROW_W3 + Z_DIM, :].set(w3)                  # (Z, HID)
    pack = pack.at[ROW_B1, :].set(b1)
    pack = pack.at[ROW_B2, :2 * Z_DIM].set(b2)
    pack = pack.at[ROW_B3, :].set(b3)
    pack = pack.at[ROW_B4:ROW_B4 + N_OUT_CHUNKS, :].set(
        b4.reshape(N_OUT_CHUNKS, HID))
    return pack


def prepare_kernel_params(raw):
    w1, w2, w3, w4, b1, b2, b3, b4 = raw
    return w1, w4, pack_small_params(w2, w3, b1, b2, b3, b4)


# ----------------------------- reference ----------------------------------

def reference_forward(x, eps, raw):
    """Pure-JAX reference from the RAW (unpacked) params, mirroring dtypes."""
    w1, w2, w3, w4, b1, b2, b3, b4 = raw
    xf = x.reshape(x.shape[0], -1).astype(jnp.bfloat16)
    h = jnp.dot(xf, w1, preferred_element_type=jnp.float32) + b1[None, :]
    h = jnp.maximum(h, 0.0)
    zh = jnp.dot(h, w2, preferred_element_type=jnp.float32) + b2[None, :]
    mu, logvar = zh[:, :Z_DIM], zh[:, Z_DIM:]
    z = mu + jnp.exp(logvar * 0.5) * eps
    h2 = jnp.maximum(b3[None, :] + z @ w3, 0.0)
    xr = jnp.dot(h2.astype(jnp.bfloat16), w4,
                 preferred_element_type=jnp.float32) + b4[None, :]
    x_recon = xr.reshape(x.shape)
    return zh.reshape(zh.shape[0], NUM_SLOTS, SLOT_DIM), x_recon, mu, logvar


# ------------------------------- test --------------------------------------

if __name__ == "__main__":
    key = jax.random.PRNGKey(0)
    kx, keps, kparam = jax.random.split(key, 3)

    x = jax.random.normal(kx, (B, NC, HW, HW), dtype=jnp.float32)
    eps = jax.random.normal(keps, (B, Z_DIM), dtype=jnp.float32)  # reparam noise

    ok = True
    # Case 1: kaiming_init semantics (zero biases).
    # Case 2: non-zero biases to exercise the bias-packing paths.
    for bias_scale in (0.0, 0.1):
        raw = init_params(kparam, bias_scale=bias_scale)
        w1, w4, pack = prepare_kernel_params(raw)

        outs = jax.block_until_ready(beta_vae_forward(x, eps, w1, w4, pack))
        refs = reference_forward(x, eps, raw)

        # bf16 MXU operands relax the tolerance slightly (both sides make the
        # same dtype choices, so only accumulation-order differences remain).
        for o, r in zip(outs, refs):
            ok &= (o.shape == r.shape) and (o.dtype == r.dtype)
            ok &= bool(jnp.allclose(o, r, atol=1e-3, rtol=1e-3))

    assert ok
    print("KERNEL_OK")
</pallas_src>

<mosaic_0001>
module attributes {stable_mosaic.version = 11 : i64} {
  func.func @_beta_vae_kernel(%arg0: memref<8x768xbf16, #tpu.memory_space<vmem>>, %arg1: memref<768x128xbf16, #tpu.memory_space<vmem>>, %arg2: memref<128x768xbf16, #tpu.memory_space<vmem>>, %arg3: memref<48x128xf32, #tpu.memory_space<vmem>>, %arg4: memref<8x128xf32, #tpu.memory_space<vmem>>, %arg5: memref<8x768xf32, #tpu.memory_space<vmem>>) attributes {dimension_semantics = [], scalar_prefetch = 0 : i64, scratch_operands = 0 : i64, tpu.core_type = #tpu.core_type<tc>} {
    %c24 = arith.constant 24 : index
    %c0 = arith.constant 0 : index
    %0 = vector.load %arg3[%c24, %c0] : memref<48x128xf32, #tpu.memory_space<vmem>>, vector<1x128xf32>
    %c0_0 = arith.constant 0 : index
    %c0_1 = arith.constant 0 : index
    %1 = vector.load %arg0[%c0_0, %c0_1] : memref<8x768xbf16, #tpu.memory_space<vmem>>, vector<8x768xbf16>
    %c0_2 = arith.constant 0 : index
    %c0_3 = arith.constant 0 : index
    %2 = vector.load %arg1[%c0_2, %c0_3] : memref<768x128xbf16, #tpu.memory_space<vmem>>, vector<768x128xbf16>
    %cst = arith.constant dense<0.000000e+00> : vector<8x128xf32>
    %3 = tpu.matmul %1, %2, %cst {dimension_numbers = #tpu.dot_dimension_numbers<[1], [0], [0], [1], [0, 0, 1, 1], [], []>} : vector<8x768xbf16>, vector<768x128xbf16>, vector<8x128xf32> -> vector<8x128xf32>
    %4 = vector.broadcast %0 : vector<1x128xf32> to vector<8x128xf32>
    %5 = arith.addf %3, %4 : vector<8x128xf32>
    %cst_4 = arith.constant 0.000000e+00 : f32
    %6 = vector.broadcast %cst_4 : f32 to vector<8x128xf32>
    %7 = arith.maximumf %5, %6 : vector<8x128xf32>
    %c0_5 = arith.constant 0 : index
    %c0_6 = arith.constant 0 : index
    %8 = vector.load %arg3[%c0_5, %c0_6] : memref<48x128xf32, #tpu.memory_space<vmem>>, vector<16x128xf32>
    %c25 = arith.constant 25 : index
    %c0_7 = arith.constant 0 : index
    %9 = vector.load %arg3[%c25, %c0_7] : memref<48x128xf32, #tpu.memory_space<vmem>>, vector<1x16xf32>
    %cst_8 = arith.constant dense<0.000000e+00> : vector<8x16xf32>
    %10 = tpu.matmul %7, %8, %cst_8 {dimension_numbers = #tpu.dot_dimension_numbers<[1], [1], [0], [0], [0, 0, 1, 0], [], []>} : vector<8x128xf32>, vector<16x128xf32>, vector<8x16xf32> -> vector<8x16xf32>
    %11 = vector.broadcast %9 : vector<1x16xf32> to vector<8x16xf32>
    %12 = arith.addf %10, %11 : vector<8x16xf32>
    %cst_9 = arith.constant 0.000000e+00 : f32
    %13 = vector.broadcast %cst_9 : f32 to vector<8x128xf32>
    %c0_10 = arith.constant 0 : index
    %c0_11 = arith.constant 0 : index
    %14 = vector.load %arg4[%c0_10, %c0_11] : memref<8x128xf32, #tpu.memory_space<vmem>>, vector<8x128xf32>
    tpu.vector_store %arg4[%c0_10, %c0_11], %13 {strides = array<i32>} : memref<8x128xf32, #tpu.memory_space<vmem>>, vector<8x128xf32>,
    %c0_12 = arith.constant 0 : index
    %c0_13 = arith.constant 0 : index
    %15 = vector.load %arg4[%c0_12, %c0_13] : memref<8x128xf32, #tpu.memory_space<vmem>>, vector<8x16xf32>
    tpu.vector_store %arg4[%c0_12, %c0_13], %12 {strides = array<i32>} : memref<8x128xf32, #tpu.memory_space<vmem>>, vector<8x16xf32>,
    %16 = vector.extract_strided_slice %12 {offsets = [0, 0], sizes = [8, 8], strides = [1, 1]} : vector<8x16xf32> to vector<8x8xf32>
    %17 = vector.extract_strided_slice %12 {offsets = [0, 8], sizes = [8, 8], strides = [1, 1]} : vector<8x16xf32> to vector<8x8xf32>
    %c33 = arith.constant 33 : index
    %c0_14 = arith.constant 0 : index
    %18 = vector.load %arg3[%c33, %c0_14] : memref<48x128xf32, #tpu.memory_space<vmem>>, vector<8x8xf32>
    %cst_15 = arith.constant 5.000000e-01 : f32
    %19 = vector.broadcast %cst_15 : f32 to vector<8x8xf32>
    %20 = arith.mulf %17, %19 : vector<8x8xf32>
    %21 = math.exp %20 : vector<8x8xf32>
    %22 = arith.mulf %21, %18 : vector<8x8xf32>
    %23 = arith.addf %16, %22 : vector<8x8xf32>
    %c26 = arith.constant 26 : index
    %c0_16 = arith.constant 0 : index
    %24 = vector.load %arg3[%c26, %c0_16] : memref<48x128xf32, #tpu.memory_space<vmem>>, vector<1x128xf32>
    %25 = vector.shape_cast %24 : vector<1x128xf32> to vector<1x128xf32>
    %26 = vector.broadcast %25 : vector<1x128xf32> to vector<8x128xf32>
    %27 = vector.extract_strided_slice %23 {offsets = [0, 0], sizes = [8, 1], strides = [1, 1]} : vector<8x8xf32> to vector<8x1xf32>
    %c16 = arith.constant 16 : index
    %c0_17 = arith.constant 0 : index
    %28 = vector.load %arg3[%c16, %c0_17] : memref<48x128xf32, #tpu.memory_space<vmem>>, vector<1x128xf32>
    %29 = vector.broadcast %27 : vector<8x1xf32> to vector<8x128xf32>
    %30 = vector.broadcast %28 : vector<1x128xf32> to vector<8x128xf32>
    %31 = arith.mulf %29, %30 : vector<8x128xf32>
    %32 = arith.addf %26, %31 : vector<8x128xf32>
    %33 = vector.extract_strided_slice %23 {offsets = [0, 1], sizes = [8, 1], strides = [1, 1]} : vector<8x8xf32> to vector<8x1xf32>
    %c17 = arith.constant 17 : index
    %c0_18 = arith.constant 0 : index
    %34 = vector.load %arg3[%c17, %c0_18] : memref<48x128xf32, #tpu.memory_space<vmem>>, vector<1x128xf32>
    %35 = vector.broadcast %33 : vector<8x1xf32> to vector<8x128xf32>
    %36 = vector.broadcast %34 : vector<1x128xf32> to vector<8x128xf32>
    %37 = arith.mulf %35, %36 : vector<8x128xf32>
    %38 = arith.addf %32, %37 : vector<8x128xf32>
    %39 = vector.extract_strided_slice %23 {offsets = [0, 2], sizes = [8, 1], strides = [1, 1]} : vector<8x8xf32> to vector<8x1xf32>
    %c18 = arith.constant 18 : index
    %c0_19 = arith.constant 0 : index
    %40 = vector.load %arg3[%c18, %c0_19] : memref<48x128xf32, #tpu.memory_space<vmem>>, vector<1x128xf32>
    %41 = vector.broadcast %39 : vector<8x1xf32> to vector<8x128xf32>
    %42 = vector.broadcast %40 : vector<1x128xf32> to vector<8x128xf32>
    %43 = arith.mulf %41, %42 : vector<8x128xf32>
    %44 = arith.addf %38, %43 : vector<8x128xf32>
    %45 = vector.extract_strided_slice %23 {offsets = [0, 3], sizes = [8, 1], strides = [1, 1]} : vector<8x8xf32> to vector<8x1xf32>
    %c19 = arith.constant 19 : index
    %c0_20 = arith.constant 0 : index
    %46 = vector.load %arg3[%c19, %c0_20] : memref<48x128xf32, #tpu.memory_space<vmem>>, vector<1x128xf32>
    %47 = vector.broadcast %45 : vector<8x1xf32> to vector<8x128xf32>
    %48 = vector.broadcast %46 : vector<1x128xf32> to vector<8x128xf32>
    %49 = arith.mulf %47, %48 : vector<8x128xf32>
    %50 = arith.addf %44, %49 : vector<8x128xf32>
    %51 = vector.extract_strided_slice %23 {offsets = [0, 4], sizes = [8, 1], strides = [1, 1]} : vector<8x8xf32> to vector<8x1xf32>
    %c20 = arith.constant 20 : index
    %c0_21 = arith.constant 0 : index
    %52 = vector.load %arg3[%c20, %c0_21] : memref<48x128xf32, #tpu.memory_space<vmem>>, vector<1x128xf32>
    %53 = vector.broadcast %51 : vector<8x1xf32> to vector<8x128xf32>
    %54 = vector.broadcast %52 : vector<1x128xf32> to vector<8x128xf32>
    %55 = arith.mulf %53, %54 : vector<8x128xf32>
    %56 = arith.addf %50, %55 : vector<8x128xf32>
    %57 = vector.extract_strided_slice %23 {offsets = [0, 5], sizes = [8, 1], strides = [1, 1]} : vector<8x8xf32> to vector<8x1xf32>
    %c21 = arith.constant 21 : index
    %c0_22 = arith.constant 0 : index
    %58 = vector.load %arg3[%c21, %c0_22] : memref<48x128xf32, #tpu.memory_space<vmem>>, vector<1x128xf32>
    %59 = vector.broadcast %57 : vector<8x1xf32> to vector<8x128xf32>
    %60 = vector.broadcast %58 : vector<1x128xf32> to vector<8x128xf32>
    %61 = arith.mulf %59, %60 : vector<8x128xf32>
    %62 = arith.addf %56, %61 : vector<8x128xf32>
    %63 = vector.extract_strided_slice %23 {offsets = [0, 6], sizes = [8, 1], strides = [1, 1]} : vector<8x8xf32> to vector<8x1xf32>
    %c22 = arith.constant 22 : index
    %c0_23 = arith.constant 0 : index
    %64 = vector.load %arg3[%c22, %c0_23] : memref<48x128xf32, #tpu.memory_space<vmem>>, vector<1x128xf32>
    %65 = vector.broadcast %63 : vector<8x1xf32> to vector<8x128xf32>
    %66 = vector.broadcast %64 : vector<1x128xf32> to vector<8x128xf32>
    %67 = arith.mulf %65, %66 : vector<8x128xf32>
    %68 = arith.addf %62, %67 : vector<8x128xf32>
    %69 = vector.extract_strided_slice %23 {offsets = [0, 7], sizes = [8, 1], strides = [1, 1]} : vector<8x8xf32> to vector<8x1xf32>
    %c23 = arith.constant 23 : index
    %c0_24 = arith.constant 0 : index
    %70 = vector.load %arg3[%c23, %c0_24] : memref<48x128xf32, #tpu.memory_space<vmem>>, vector<1x128xf32>
    %71 = vector.broadcast %69 : vector<8x1xf32> to vector<8x128xf32>
    %72 = vector.broadcast %70 : vector<1x128xf32> to vector<8x128xf32>
    %73 = arith.mulf %71, %72 : vector<8x128xf32>
    %74 = arith.addf %68, %73 : vector<8x128xf32>
    %cst_25 = arith.constant 0.000000e+00 : f32
    %75 = vector.broadcast %cst_25 : f32 to vector<8x128xf32>
    %76 = arith.maximumf %74, %75 : vector<8x128xf32>
    %77 = arith.truncf %76 : vector<8x128xf32> to vector<8x128xbf16>
    %c0_26 = arith.constant 0 : index
    %c0_27 = arith.constant 0 : index
    %78 = vector.load %arg2[%c0_26, %c0_27] : memref<128x768xbf16, #tpu.memory_space<vmem>>, vector<128x768xbf16>
    %cst_28 = arith.constant dense<0.000000e+00> : vector<8x768xf32>
    %79 = tpu.matmul %77, %78, %cst_28 {dimension_numbers = #tpu.dot_dimension_numbers<[1], [0], [0], [1], [0, 0, 1, 1], [], []>} : vector<8x128xbf16>, vector<128x768xbf16>, vector<8x768xf32> -> vector<8x768xf32>
    %80 = vector.extract_strided_slice %79 {offsets = [0, 0], sizes = [8, 128], strides = [1, 1]} : vector<8x768xf32> to vector<8x128xf32>
    %c27 = arith.constant 27 : index
    %c0_29 = arith.constant 0 : index
    %81 = vector.load %arg3[%c27, %c0_29] : memref<48x128xf32, #tpu.memory_space<vmem>>, vector<1x128xf32>
    %82 = vector.broadcast %81 : vector<1x128xf32> to vector<8x128xf32>
    %83 = arith.addf %80, %82 : vector<8x128xf32>
    %c0_30 = arith.constant 0 : index
    %c0_31 = arith.constant 0 : index
    %84 = vector.load %arg5[%c0_30, %c0_31] : memref<8x768xf32, #tpu.memory_space<vmem>>, vector<8x128xf32>
    tpu.vector_store %arg5[%c0_30, %c0_31], %83 {strides = array<i32>} : memref<8x768xf32, #tpu.memory_space<vmem>>, vector<8x128xf32>,
    %85 = vector.extract_strided_slice %79 {offsets = [0, 128], sizes = [8, 128], strides = [1, 1]} : vector<8x768xf32> to vector<8x128xf32>
    %c28 = arith.constant 28 : index
    %c0_32 = arith.constant 0 : index
    %86 = vector.load %arg3[%c28, %c0_32] : memref<48x128xf32, #tpu.memory_space<vmem>>, vector<1x128xf32>
    %87 = vector.broadcast %86 : vector<1x128xf32> to vector<8x128xf32>
    %88 = arith.addf %85, %87 : vector<8x128xf32>
    %c0_33 = arith.constant 0 : index
    %c128 = arith.constant 128 : index
    %89 = vector.load %arg5[%c0_33, %c128] : memref<8x768xf32, #tpu.memory_space<vmem>>, vector<8x128xf32>
    tpu.vector_store %arg5[%c0_33, %c128], %88 {strides = array<i32>} : memref<8x768xf32, #tpu.memory_space<vmem>>, vector<8x128xf32>,
    %90 = vector.extract_strided_slice %79 {offsets = [0, 256], sizes = [8, 128], strides = [1, 1]} : vector<8x768xf32> to vector<8x128xf32>
    %c29 = arith.constant 29 : index
    %c0_34 = arith.constant 0 : index
    %91 = vector.load %arg3[%c29, %c0_34] : memref<48x128xf32, #tpu.memory_space<vmem>>, vector<1x128xf32>
    %92 = vector.broadcast %91 : vector<1x128xf32> to vector<8x128xf32>
    %93 = arith.addf %90, %92 : vector<8x128xf32>
    %c0_35 = arith.constant 0 : index
    %c256 = arith.constant 256 : index
    %94 = vector.load %arg5[%c0_35, %c256] : memref<8x768xf32, #tpu.memory_space<vmem>>, vector<8x128xf32>
    tpu.vector_store %arg5[%c0_35, %c256], %93 {strides = array<i32>} : memref<8x768xf32, #tpu.memory_space<vmem>>, vector<8x128xf32>,
    %95 = vector.extract_strided_slice %79 {offsets = [0, 384], sizes = [8, 128], strides = [1, 1]} : vector<8x768xf32> to vector<8x128xf32>
    %c30 = arith.constant 30 : index
    %c0_36 = arith.constant 0 : index
    %96 = vector.load %arg3[%c30, %c0_36] : memref<48x128xf32, #tpu.memory_space<vmem>>, vector<1x128xf32>
    %97 = vector.broadcast %96 : vector<1x128xf32> to vector<8x128xf32>
    %98 = arith.addf %95, %97 : vector<8x128xf32>
    %c0_37 = arith.constant 0 : index
    %c384 = arith.constant 384 : index
    %99 = vector.load %arg5[%c0_37, %c384] : memref<8x768xf32, #tpu.memory_space<vmem>>, vector<8x128xf32>
    tpu.vector_store %arg5[%c0_37, %c384], %98 {strides = array<i32>} : memref<8x768xf32, #tpu.memory_space<vmem>>, vector<8x128xf32>,
    %100 = vector.extract_strided_slice %79 {offsets = [0, 512], sizes = [8, 128], strides = [1, 1]} : vector<8x768xf32> to vector<8x128xf32>
    %c31 = arith.constant 31 : index
    %c0_38 = arith.constant 0 : index
    %101 = vector.load %arg3[%c31, %c0_38] : memref<48x128xf32, #tpu.memory_space<vmem>>, vector<1x128xf32>
    %102 = vector.broadcast %101 : vector<1x128xf32> to vector<8x128xf32>
    %103 = arith.addf %100, %102 : vector<8x128xf32>
    %c0_39 = arith.constant 0 : index
    %c512 = arith.constant 512 : index
    %104 = vector.load %arg5[%c0_39, %c512] : memref<8x768xf32, #tpu.memory_space<vmem>>, vector<8x128xf32>
    tpu.vector_store %arg5[%c0_39, %c512], %103 {strides = array<i32>} : memref<8x768xf32, #tpu.memory_space<vmem>>, vector<8x128xf32>,
    %105 = vector.extract_strided_slice %79 {offsets = [0, 640], sizes = [8, 128], strides = [1, 1]} : vector<8x768xf32> to vector<8x128xf32>
    %c32 = arith.constant 32 : index
    %c0_40 = arith.constant 0 : index
    %106 = vector.load %arg3[%c32, %c0_40] : memref<48x128xf32, #tpu.memory_space<vmem>>, vector<1x128xf32>
    %107 = vector.broadcast %106 : vector<1x128xf32> to vector<8x128xf32>
    %108 = arith.addf %105, %107 : vector<8x128xf32>
    %c0_41 = arith.constant 0 : index
    %c640 = arith.constant 640 : index
    %109 = vector.load %arg5[%c0_41, %c640] : memref<8x768xf32, #tpu.memory_space<vmem>>, vector<8x128xf32>
    tpu.vector_store %arg5[%c0_41, %c640], %108 {strides = array<i32>} : memref<8x768xf32, #tpu.memory_space<vmem>>, vector<8x128xf32>,
    return
  }
}

</mosaic_0001>

<llo_original>
// kernel: beta_vae_forward.1
$region0: #{beta_vae_forward.1}
  #allocation0 [shape = 'u32[]', space=smem, size = 0x4, offset = 0x4, fixed_abs, tag = 'smem constant byte address 0x4 - core index']
  #allocation1 [shape = 'u32[144,128]{1,0:T(1,128)}', space=vmem, size = 0x12000, scoped, tag = 'internal scratch']
  %s0 = inlined_call_operand.vmem [shape: bf16[8,768], index: 0, kind: input, shape index: {}]
  %s1 = inlined_call_operand.hbm [shape: bf16[768,128], index: 1, kind: input, shape index: {}]
  %s2 = inlined_call_operand.hbm [shape: bf16[128,768], index: 2, kind: input, shape index: {}]
  %s3 = inlined_call_operand.vmem [shape: f32[48,128], index: 3, kind: input, shape index: {}]
  %s4 = inlined_call_operand.vmem [shape: f32[8,128], index: 4, kind: output, shape index: {0}]
  %s5 = inlined_call_operand.vmem [shape: f32[8,768], index: 5, kind: output, shape index: {1}]
  %6 = xla_tuple %s4, %s5
  %s7 = sld [smem:[#allocation0]]
  $region42: #{beta_vae_forward.1} parent=0
    _
  %s9 = ssub.s32 1, %s7
  %s10 = scalar_select 0, %s9, %s7
  $region1: #{beta_vae_forward.1} parent=0
    #allocation2 [shape = 'u8[196608]{0}', space=vmem, size = 0x30000, scoped, tag = 'input window, operand 1, single buffered']
    #allocation3 [shape = 's32[1]{0}', space=sflag, size = 0x4, scoped, tag = 'scoped memory for beta_vae_forward.1']
    #allocation4 [shape = 'u8[196608]{0}', space=vmem, size = 0x30000, scoped, tag = 'input window, operand 2, single buffered']
    #allocation5 [shape = 's32[1]{0}', space=sflag, size = 0x4, scoped, tag = 'scoped memory for beta_vae_forward.1']
    %11 = vsyncpa [#allocation3], 0
    %12 = vsyncpa [#allocation5], 0
    // Predicated region
    $region2: #{beta_vae_forward.1} parent=1 // pred_check
      _
    $region3: #{beta_vae_forward.1} parent=1 // pred_check_branch
      %14 = sbr.rel (0) target = $region5
    $region4: #{beta_vae_forward.1} parent=1 // pred_region
      _
    $region5: #{beta_vae_forward.1} parent=1 // pred_fallthru
      _
    // Predicated region
    $region6: #{beta_vae_forward.1} parent=1 // pred_check
      _
    $region7: #{beta_vae_forward.1} parent=1 // pred_check_branch
      %16 = sbr.rel (0) target = $region9
    $region8: #{beta_vae_forward.1} parent=1 // pred_region
      %s18 = ssub.s32 6144, 6144
      %19 = vsyncadd [#allocation3], %s18
      %s20 = sshll.u32 [#allocation2], 4
      %s21 = int_to_ptr.vmem [resolvable:$true] %s20
      %26 = dma.hbm_to_vmem [thread:$0]  %s1, 6144, %s21, [#allocation3], 64, 64, 4
    $region9: #{beta_vae_forward.1} parent=1 // pred_fallthru
      _
    // Predicated region
    $region10: #{beta_vae_forward.1} parent=1 // pred_check
      _
    $region11: #{beta_vae_forward.1} parent=1 // pred_check_branch
      %28 = sbr.rel (0) target = $region13
    $region12: #{beta_vae_forward.1} parent=1 // pred_region
      %s30 = ssub.s32 6144, 6144
      %31 = vsyncadd [#allocation5], %s30
      %s32 = sshll.u32 [#allocation4], 4
      %s33 = int_to_ptr.vmem [resolvable:$true] %s32
      %38 = dma.hbm_to_vmem [thread:$0]  %s2, 6144, %s33, [#allocation5], 384, 384, 24
    $region13: #{beta_vae_forward.1} parent=1 // pred_fallthru
      _
    // Predicated region
    $region14: #{beta_vae_forward.1} parent=1 // pred_check
      _
    $region15: #{beta_vae_forward.1} parent=1 // pred_check_branch
      %40 = sbr.rel (0) target = $region17
    $region16: #{beta_vae_forward.1} parent=1 // pred_region
      _
    $region17: #{beta_vae_forward.1} parent=1 // pred_fallthru
      _
    // Predicated region
    $region18: #{beta_vae_forward.1} parent=1 // pred_check
      _
    $region19: #{beta_vae_forward.1} parent=1 // pred_check_branch
      %42 = sbr.rel (0) target = $region21
    $region20: #{beta_vae_forward.1} parent=1 // pred_region
      %43 = dma.done [#allocation3], 6144
    $region21: #{beta_vae_forward.1} parent=1 // pred_fallthru
      _
    // Predicated region
    $region22: #{beta_vae_forward.1} parent=1 // pred_check
      _
    $region23: #{beta_vae_forward.1} parent=1 // pred_check_branch
      %45 = sbr.rel (0) target = $region25
    $region24: #{beta_vae_forward.1} parent=1 // pred_region
      %46 = dma.done [#allocation5], 6144
    $region25: #{beta_vae_forward.1} parent=1 // pred_fallthru
      _
    %v48 = vld [vmem:[%s3 + $0x18] sm:$0x1]
    %v49 = vld [vmem:[%s0] sm:$0xff]
    %v50 = vld [vmem:[%s0 + $0x8] sm:$0xff]
    %v51 = vld [vmem:[%s0 + $0x10] sm:$0xff]
    %v52 = vld [vmem:[#allocation2] sm:$0xf]
    %v53 = vld [vmem:[#allocation2 + $0x4] sm:$0xf]
    %v54 = vld [vmem:[#allocation2 + $0x8] sm:$0xf]
    %v55 = vld [vmem:[#allocation2 + $0xc] sm:$0xf]
    %v56 = vld [vmem:[#allocation2 + $0x10] sm:$0xf]
    %v57 = vld [vmem:[#allocation2 + $0x14] sm:$0xf]
    %v58 = vld [vmem:[#allocation2 + $0x18] sm:$0xf]
    %v59 = vld [vmem:[#allocation2 + $0x1c] sm:$0xf]
    %v60 = vld [vmem:[#allocation2 + $0x20] sm:$0xf]
    %v61 = vld [vmem:[#allocation2 + $0x24] sm:$0xf]
    %v62 = vld [vmem:[#allocation2 + $0x28] sm:$0xf]
    %v63 = vld [vmem:[#allocation2 + $0x2c] sm:$0xf]
    %v64 = vld [vmem:[#allocation2 + $0x30] sm:$0xf]
    %v65 = vld [vmem:[#allocation2 + $0x34] sm:$0xf]
    %v66 = vld [vmem:[#allocation2 + $0x38] sm:$0xf]
    %v67 = vld [vmem:[#allocation2 + $0x3c] sm:$0xf]
    %v68 = vld [vmem:[#allocation2 + $0x40] sm:$0xf]
    %v69 = vld [vmem:[#allocation2 + $0x44] sm:$0xf]
    %v70 = vld [vmem:[#allocation2 + $0x48] sm:$0xf]
    %v71 = vld [vmem:[#allocation2 + $0x4c] sm:$0xf]
    %v72 = vld [vmem:[#allocation2 + $0x50] sm:$0xf]
    %v73 = vld [vmem:[#allocation2 + $0x54] sm:$0xf]
    %v74 = vld [vmem:[#allocation2 + $0x58] sm:$0xf]
    %v75 = vld [vmem:[#allocation2 + $0x5c] sm:$0xf]
    %v76 = vld [vmem:[#allocation2 + $0x60] sm:$0xf]
    %v77 = vld [vmem:[#allocation2 + $0x64] sm:$0xf]
    %v78 = vld [vmem:[#allocation2 + $0x68] sm:$0xf]
    %v79 = vld [vmem:[#allocation2 + $0x6c] sm:$0xf]
    %v80 = vld [vmem:[#allocation2 + $0x70] sm:$0xf]
    %v81 = vld [vmem:[#allocation2 + $0x74] sm:$0xf]
    %v82 = vld [vmem:[#allocation2 + $0x78] sm:$0xf]
    %v83 = vld [vmem:[#allocation2 + $0x7c] sm:$0xf]
    %v84 = vld [vmem:[#allocation2 + $0x80] sm:$0xf]
    %v85 = vld [vmem:[#allocation2 + $0x84] sm:$0xf]
    %v86 = vld [vmem:[#allocation2 + $0x88] sm:$0xf]
    %v87 = vld [vmem:[#allocation2 + $0x8c] sm:$0xf]
    %v88 = vld [vmem:[#allocation2 + $0x90] sm:$0xf]
    %v89 = vld [vmem:[#allocation2 + $0x94] sm:$0xf]
    %v90 = vld [vmem:[#allocation2 + $0x98] sm:$0xf]
    %v91 = vld [vmem:[#allocation2 + $0x9c] sm:$0xf]
    %v92 = vld [vmem:[#allocation2 + $0xa0] sm:$0xf]
    %v93 = vld [vmem:[#allocation2 + $0xa4] sm:$0xf]
    %v94 = vld [vmem:[#allocation2 + $0xa8] sm:$0xf]
    %v95 = vld [vmem:[#allocation2 + $0xac] sm:$0xf]
    %v96 = vld [vmem:[#allocation2 + $0xb0] sm:$0xf]
    %v97 = vld [vmem:[#allocation2 + $0xb4] sm:$0xf]
    %v98 = vld [vmem:[#allocation2 + $0xb8] sm:$0xf]
    %v99 = vld [vmem:[#allocation2 + $0xbc] sm:$0xf]
    %v100 = vld [vmem:[#allocation2 + $0xc0] sm:$0xf]
    %v101 = vld [vmem:[#allocation2 + $0xc4] sm:$0xf]
    %v102 = vld [vmem:[#allocation2 + $0xc8] sm:$0xf]
    %v103 = vld [vmem:[#allocation2 + $0xcc] sm:$0xf]
    %v104 = vld [vmem:[#allocation2 + $0xd0] sm:$0xf]
    %v105 = vld [vmem:[#allocation2 + $0xd4] sm:$0xf]
    %v106 = vld [vmem:[#allocation2 + $0xd8] sm:$0xf]
    %v107 = vld [vmem:[#allocation2 + $0xdc] sm:$0xf]
    %v108 = vld [vmem:[#allocation2 + $0xe0] sm:$0xf]
    %v109 = vld [vmem:[#allocation2 + $0xe4] sm:$0xf]
    %v110 = vld [vmem:[#allocation2 + $0xe8] sm:$0xf]
    %v111 = vld [vmem:[#allocation2 + $0xec] sm:$0xf]
    %v112 = vld [vmem:[#allocation2 + $0xf0] sm:$0xf]
    %v113 = vld [vmem:[#allocation2 + $0xf4] sm:$0xf]
    %v114 = vld [vmem:[#allocation2 + $0xf8] sm:$0xf]
    %v115 = vld [vmem:[#allocation2 + $0xfc] sm:$0xf]
    %v116 = vld [vmem:[#allocation2 + $0x100] sm:$0xf]
    %v117 = vld [vmem:[#allocation2 + $0x104] sm:$0xf]
    %v118 = vld [vmem:[#allocation2 + $0x108] sm:$0xf]
    %v119 = vld [vmem:[#allocation2 + $0x10c] sm:$0xf]
    %v120 = vld [vmem:[#allocation2 + $0x110] sm:$0xf]
    %v121 = vld [vmem:[#allocation2 + $0x114] sm:$0xf]
    %v122 = vld [vmem:[#allocation2 + $0x118] sm:$0xf]
    %v123 = vld [vmem:[#allocation2 + $0x11c] sm:$0xf]
    %v124 = vld [vmem:[#allocation2 + $0x120] sm:$0xf]
    %v125 = vld [vmem:[#allocation2 + $0x124] sm:$0xf]
    %v126 = vld [vmem:[#allocation2 + $0x128] sm:$0xf]
    %v127 = vld [vmem:[#allocation2 + $0x12c] sm:$0xf]
    %v128 = vld [vmem:[#allocation2 + $0x130] sm:$0xf]
    %v129 = vld [vmem:[#allocation2 + $0x134] sm:$0xf]
    %v130 = vld [vmem:[#allocation2 + $0x138] sm:$0xf]
    %v131 = vld [vmem:[#allocation2 + $0x13c] sm:$0xf]
    %v132 = vld [vmem:[#allocation2 + $0x140] sm:$0xf]
    %v133 = vld [vmem:[#allocation2 + $0x144] sm:$0xf]
    %v134 = vld [vmem:[#allocation2 + $0x148] sm:$0xf]
    %v135 = vld [vmem:[#allocation2 + $0x14c] sm:$0xf]
    %v136 = vld [vmem:[#allocation2 + $0x150] sm:$0xf]
    %v137 = vld [vmem:[#allocation2 + $0x154] sm:$0xf]
    %v138 = vld [vmem:[#allocation2 + $0x158] sm:$0xf]
    %v139 = vld [vmem:[#allocation2 + $0x15c] sm:$0xf]
    %v140 = vld [vmem:[#allocation2 + $0x160] sm:$0xf]
    %v141 = vld [vmem:[#allocation2 + $0x164] sm:$0xf]
    %v142 = vld [vmem:[#allocation2 + $0x168] sm:$0xf]
    %v143 = vld [vmem:[#allocation2 + $0x16c] sm:$0xf]
    %v144 = vld [vmem:[#allocation2 + $0x170] sm:$0xf]
    %v145 = vld [vmem:[#allocation2 + $0x174] sm:$0xf]
    %v146 = vld [vmem:[#allocation2 + $0x178] sm:$0xf]
    %v147 = vld [vmem:[#allocation2 + $0x17c] sm:$0xf]
    %v148 = vlaneseq
    %v149 = vshrl.u32 %v148, 7
    %v150 = vsub.s32 0, %v149
    %v151 = vrot.slane %v48, %v150
    %v155 = vunpack.c.l.b16 %v49
    %v156 = vunpack.c.h.b16 %v49
    %v157 = vunpack.c.l.b16 %v50
    %v158 = vunpack.c.h.b16 %v50
    %v159 = vunpack.c.l.b16 %v51
    %v160 = vunpack.c.h.b16 %v51
    %v161 = vpack.c.b16 %v155, %v155
    %v162 = vpack.c.b16 %v156, %v156
    %v163 = vpack.c.b16 %v157, %v157
    %v164 = vpack.c.b16 %v158, %v158
    %v165 = vpack.c.b16 %v159, %v159
    %v166 = vpack.c.b16 %v160, %v160
    %v269 = vunpack.c.l.b16 %v52
    %v270 = vunpack.c.l.b16 %v53
    %v271 = vunpack.c.l.b16 %v54
    %v272 = vunpack.c.l.b16 %v55
    %v273 = vunpack.c.l.b16 %v56
    %v274 = vunpack.c.l.b16 %v57
    %v275 = vunpack.c.l.b16 %v58
    %v276 = vunpack.c.l.b16 %v59
    %v277 = vunpack.c.l.b16 %v60
    %v278 = vunpack.c.l.b16 %v61
    %v279 = vunpack.c.l.b16 %v62
    %v280 = vunpack.c.l.b16 %v63
    %v281 = vunpack.c.l.b16 %v64
    %v282 = vunpack.c.l.b16 %v65
    %v283 = vunpack.c.l.b16 %v66
    %v284 = vunpack.c.l.b16 %v67
    %v285 = vunpack.c.l.b16 %v68
    %v286 = vunpack.c.l.b16 %v69
    %v287 = vunpack.c.l.b16 %v70
    %v288 = vunpack.c.l.b16 %v71
    %v289 = vunpack.c.l.b16 %v72
    %v290 = vunpack.c.l.b16 %v73
    %v291 = vunpack.c.l.b16 %v74
    %v292 = vunpack.c.l.b16 %v75
    %v293 = vunpack.c.l.b16 %v76
    %v294 = vunpack.c.l.b16 %v77
    %v295 = vunpack.c.l.b16 %v78
    %v296 = vunpack.c.l.b16 %v79
    %v297 = vunpack.c.l.b16 %v80
    %v298 = vunpack.c.l.b16 %v81
    %v299 = vunpack.c.l.b16 %v82
    %v300 = vunpack.c.l.b16 %v83
    %v301 = vunpack.c.l.b16 %v84
    %v302 = vunpack.c.l.b16 %v85
    %v303 = vunpack.c.l.b16 %v86
    %v304 = vunpack.c.l.b16 %v87
    %v305 = vunpack.c.l.b16 %v88
    %v306 = vunpack.c.l.b16 %v89
    %v307 = vunpack.c.l.b16 %v90
    %v308 = vunpack.c.l.b16 %v91
    %v309 = vunpack.c.l.b16 %v92
    %v310 = vunpack.c.l.b16 %v93
    %v311 = vunpack.c.l.b16 %v94
    %v312 = vunpack.c.l.b16 %v95
    %v313 = vunpack.c.l.b16 %v96
    %v314 = vunpack.c.l.b16 %v97
    %v315 = vunpack.c.l.b16 %v98
    %v316 = vunpack.c.l.b16 %v99
    %v317 = vunpack.c.l.b16 %v100
    %v318 = vunpack.c.l.b16 %v101
    %v319 = vunpack.c.l.b16 %v102
    %v320 = vunpack.c.l.b16 %v103
    %v321 = vunpack.c.l.b16 %v104
    %v322 = vunpack.c.l.b16 %v105
    %v323 = vunpack.c.l.b16 %v106
    %v324 = vunpack.c.l.b16 %v107
    %v325 = vunpack.c.l.b16 %v108
    %v326 = vunpack.c.l.b16 %v109
    %v327 = vunpack.c.l.b16 %v110
    %v328 = vunpack.c.l.b16 %v111
    %v329 = vunpack.c.l.b16 %v112
    %v330 = vunpack.c.l.b16 %v113
    %v331 = vunpack.c.l.b16 %v114
    %v332 = vunpack.c.l.b16 %v115
    %v333 = vunpack.c.l.b16 %v116
    %v334 = vunpack.c.l.b16 %v117
    %v335 = vunpack.c.l.b16 %v118
    %v336 = vunpack.c.l.b16 %v119
    %v337 = vunpack.c.l.b16 %v120
    %v338 = vunpack.c.l.b16 %v121
    %v339 = vunpack.c.l.b16 %v122
    %v340 = vunpack.c.l.b16 %v123
    %v341 = vunpack.c.l.b16 %v124
    %v342 = vunpack.c.l.b16 %v125
    %v343 = vunpack.c.l.b16 %v126
    %v344 = vunpack.c.l.b16 %v127
    %v345 = vunpack.c.l.b16 %v128
    %v346 = vunpack.c.l.b16 %v129
    %v347 = vunpack.c.l.b16 %v130
    %v348 = vunpack.c.l.b16 %v131
    %v349 = vunpack.c.l.b16 %v132
    %v350 = vunpack.c.l.b16 %v133
    %v351 = vunpack.c.l.b16 %v134
    %v352 = vunpack.c.l.b16 %v135
    %v353 = vunpack.c.l.b16 %v136
    %v354 = vunpack.c.l.b16 %v137
    %v355 = vunpack.c.l.b16 %v138
    %v356 = vunpack.c.l.b16 %v139
    %v357 = vunpack.c.l.b16 %v140
    %v358 = vunpack.c.l.b16 %v141
    %v359 = vunpack.c.l.b16 %v142
    %v360 = vunpack.c.l.b16 %v143
    %v361 = vunpack.c.l.b16 %v144
    %v362 = vunpack.c.l.b16 %v145
    %v363 = vunpack.c.l.b16 %v146
    %v364 = vunpack.c.l.b16 %v147
    %v365 = vpack.c.b16 %v270, %v269
    %v366 = vpack.c.b16 %v272, %v271
    %v367 = vpack.c.b16 %v274, %v273
    %v368 = vpack.c.b16 %v276, %v275
    %v369 = vpack.c.b16 %v278, %v277
    %v370 = vpack.c.b16 %v280, %v279
    %v371 = vpack.c.b16 %v282, %v281
    %v372 = vpack.c.b16 %v284, %v283
    %v373 = vpack.c.b16 %v286, %v285
    %v374 = vpack.c.b16 %v288, %v287
    %v375 = vpack.c.b16 %v290, %v289
    %v376 = vpack.c.b16 %v292, %v291
    %v377 = vpack.c.b16 %v294, %v293
    %v378 = vpack.c.b16 %v296, %v295
    %v379 = vpack.c.b16 %v298, %v297
    %v380 = vpack.c.b16 %v300, %v299
    %v381 = vpack.c.b16 %v302, %v301
    %v382 = vpack.c.b16 %v304, %v303
    %v383 = vpack.c.b16 %v306, %v305
    %v384 = vpack.c.b16 %v308, %v307
    %v385 = vpack.c.b16 %v310, %v309
    %v386 = vpack.c.b16 %v312, %v311
    %v387 = vpack.c.b16 %v314, %v313
    %v388 = vpack.c.b16 %v316, %v315
    %v389 = vpack.c.b16 %v318, %v317
    %v390 = vpack.c.b16 %v320, %v319
    %v391 = vpack.c.b16 %v322, %v321
    %v392 = vpack.c.b16 %v324, %v323
    %v393 = vpack.c.b16 %v326, %v325
    %v394 = vpack.c.b16 %v328, %v327
    %v395 = vpack.c.b16 %v330, %v329
    %v396 = vpack.c.b16 %v332, %v331
    %v397 = vpack.c.b16 %v334, %v333
    %v398 = vpack.c.b16 %v336, %v335
    %v399 = vpack.c.b16 %v338, %v337
    %v400 = vpack.c.b16 %v340, %v339
    %v401 = vpack.c.b16 %v342, %v341
    %v402 = vpack.c.b16 %v344, %v343
    %v403 = vpack.c.b16 %v346, %v345
    %v404 = vpack.c.b16 %v348, %v347
    %v405 = vpack.c.b16 %v350, %v349
    %v406 = vpack.c.b16 %v352, %v351
    %v407 = vpack.c.b16 %v354, %v353
    %v408 = vpack.c.b16 %v356, %v355
    %v409 = vpack.c.b16 %v358, %v357
    %v410 = vpack.c.b16 %v360, %v359
    %v411 = vpack.c.b16 %v362, %v361
    %v412 = vpack.c.b16 %v364, %v363
    %461 = vmatprep.subr.bf16.mxu0 0
    %462 = vmatpush1.bf16.msra.mxu0 %v365
    %463 = vmatprep.subr.bf16.mxu0 0
    %464 = vmatpush1.bf16.msra.mxu0 %v366
    %465 = vmatprep.subr.bf16.mxu0 0
    %466 = vmatpush1.bf16.msra.mxu0 %v367
    %467 = vmatprep.subr.bf16.mxu0 0
    %468 = vmatpush1.bf16.msra.mxu0 %v368
    %469 = vmatprep.subr.bf16.mxu0 0
    %470 = vmatpush1.bf16.msra.mxu0 %v369
    %471 = vmatprep.subr.bf16.mxu0 0
    %472 = vmatpush1.bf16.msra.mxu0 %v370
    %473 = vmatprep.subr.bf16.mxu0 0
    %474 = vmatpush1.bf16.msra.mxu0 %v371
    %475 = vmatprep.subr.bf16.mxu0 0
    %476 = vmatpush1.bf16.msra.mxu0 %v372
    %477 = vmatprep.subr.bf16.mxu0 0
    %478 = vmatpush1.bf16.msra.mxu0 %v373
    %479 = vmatprep.subr.bf16.mxu0 0
    %480 = vmatpush1.bf16.msra.mxu0 %v374
    %481 = vmatprep.subr.bf16.mxu0 0
    %482 = vmatpush1.bf16.msra.mxu0 %v375
    %483 = vmatprep.subr.bf16.mxu0 0
    %484 = vmatpush1.bf16.msra.mxu0 %v376
    %485 = vmatprep.subr.bf16.mxu0 0
    %486 = vmatpush1.bf16.msra.mxu0 %v377
    %487 = vmatprep.subr.bf16.mxu0 0
    %488 = vmatpush1.bf16.msra.mxu0 %v378
    %489 = vmatprep.subr.bf16.mxu0 0
    %490 = vmatpush1.bf16.msra.mxu0 %v379
    %491 = vmatprep.subr.bf16.mxu0 0
    %492 = vmatpush1.bf16.msra.mxu0 %v380
    %493 = vmatprep.mubr.bf16.mxu0 %v162
    %494 = vmatmul.mubr.bf16.gmra.mrb[0].mxu0 %v161
    %v495 = vpop.f32.mrb[0].mxu0
    %v496 = vadd.f32 %v151, %v495
    %v497 = vpop.f32.mrb[0].mxu0
    %v498 = vpop.f32.mrb[0].mxu0
    %v499 = vpop.f32.mrb[0].mxu0
    %500 = vdwg.mxu0
    %501 = vmatprep.subr.bf16.mxu0 0
    %502 = vmatpush1.bf16.msra.mxu0 %v381
    %503 = vmatprep.subr.bf16.mxu0 0
    %504 = vmatpush1.bf16.msra.mxu0 %v382
    %505 = vmatprep.subr.bf16.mxu0 0
    %506 = vmatpush1.bf16.msra.mxu0 %v383
    %507 = vmatprep.subr.bf16.mxu0 0
    %508 = vmatpush1.bf16.msra.mxu0 %v384
    %509 = vmatprep.subr.bf16.mxu0 0
    %510 = vmatpush1.bf16.msra.mxu0 %v385
    %511 = vmatprep.subr.bf16.mxu0 0
    %512 = vmatpush1.bf16.msra.mxu0 %v386
    %513 = vmatprep.subr.bf16.mxu0 0
    %514 = vmatpush1.bf16.msra.mxu0 %v387
    %515 = vmatprep.subr.bf16.mxu0 0
    %516 = vmatpush1.bf16.msra.mxu0 %v388
    %517 = vmatprep.subr.bf16.mxu0 0
    %518 = vmatpush1.bf16.msra.mxu0 %v389
    %519 = vmatprep.subr.bf16.mxu0 0
    %520 = vmatpush1.bf16.msra.mxu0 %v390
    %521 = vmatprep.subr.bf16.mxu0 0
    %522 = vmatpush1.bf16.msra.mxu0 %v391
    %523 = vmatprep.subr.bf16.mxu0 0
    %524 = vmatpush1.bf16.msra.mxu0 %v392
    %525 = vmatprep.subr.bf16.mxu0 0
    %526 = vmatpush1.bf16.msra.mxu0 %v393
    %527 = vmatprep.subr.bf16.mxu0 0
    %528 = vmatpush1.bf16.msra.mxu0 %v394
    %529 = vmatprep.subr.bf16.mxu0 0
    %530 = vmatpush1.bf16.msra.mxu0 %v395
    %531 = vmatprep.subr.bf16.mxu0 0
    %532 = vmatpush1.bf16.msra.mxu0 %v396
    %533 = vmatprep.mubr.bf16.mxu0 %v164
    %534 = vmatmul.mubr.bf16.gmra.mrb[0].mxu0 %v163
    %v535 = vpop.f32.mrb[0].mxu0
    %v536 = vadd.f32 %v496, %v535
    %v537 = vpop.f32.mrb[0].mxu0
    %v538 = vpop.f32.mrb[0].mxu0
    %v539 = vpop.f32.mrb[0].mxu0
    %540 = vdwg.mxu0
    %541 = vmatprep.subr.bf16.mxu0 0
    %542 = vmatpush1.bf16.msra.mxu0 %v397
    %543 = vmatprep.subr.bf16.mxu0 0
    %544 = vmatpush1.bf16.msra.mxu0 %v398
    %545 = vmatprep.subr.bf16.mxu0 0
    %546 = vmatpush1.bf16.msra.mxu0 %v399
    %547 = vmatprep.subr.bf16.mxu0 0
    %548 = vmatpush1.bf16.msra.mxu0 %v400
    %549 = vmatprep.subr.bf16.mxu0 0
    %550 = vmatpush1.bf16.msra.mxu0 %v401
    %551 = vmatprep.subr.bf16.mxu0 0
    %552 = vmatpush1.bf16.msra.mxu0 %v402
    %553 = vmatprep.subr.bf16.mxu0 0
    %554 = vmatpush1.bf16.msra.mxu0 %v403
    %555 = vmatprep.subr.bf16.mxu0 0
    %556 = vmatpush1.bf16.msra.mxu0 %v404
    %557 = vmatprep.subr.bf16.mxu0 0
    %558 = vmatpush1.bf16.msra.mxu0 %v405
    %559 = vmatprep.subr.bf16.mxu0 0
    %560 = vmatpush1.bf16.msra.mxu0 %v406
    %561 = vmatprep.subr.bf16.mxu0 0
    %562 = vmatpush1.bf16.msra.mxu0 %v407
    %563 = vmatprep.subr.bf16.mxu0 0
    %564 = vmatpush1.bf16.msra.mxu0 %v408
    %565 = vmatprep.subr.bf16.mxu0 0
    %566 = vmatpush1.bf16.msra.mxu0 %v409
    %567 = vmatprep.subr.bf16.mxu0 0
    %568 = vmatpush1.bf16.msra.mxu0 %v410
    %569 = vmatprep.subr.bf16.mxu0 0
    %570 = vmatpush1.bf16.msra.mxu0 %v411
    %571 = vmatprep.subr.bf16.mxu0 0
    %572 = vmatpush1.bf16.msra.mxu0 %v412
    %573 = vmatprep.mubr.bf16.mxu0 %v166
    %574 = vmatmul.mubr.bf16.gmra.mrb[0].mxu0 %v165
    %v575 = vpop.f32.mrb[0].mxu0
    %v576 = vadd.f32 %v536, %v575
    %v577 = vpop.f32.mrb[0].mxu0
    %v578 = vpop.f32.mrb[0].mxu0
    %v579 = vpop.f32.mrb[0].mxu0
    %580 = vdwg.mxu0
    %v581 = vmax.f32 %v576, 0.0
    %v582 = vld [vmem:[%s3] sm:$0xff]
    %v583 = vld [vmem:[%s3 + $0x8] sm:$0xff]
    %v584 = vld [vmem:[%s3 + $0x19] sm:$0x1]
    %v585 = vlaneseq
    %v586 = vshrl.u32 %v585, 7
    %v587 = vsub.s32 0, %v586
    %v588 = vrot.slane %v584, %v587
    %589 = vmatprep.subr.mxu0 0.0
    %590 = vmatpush1.xpose.msra.mxu0 %v582
    %591 = vmatprep.subr.mxu0 0.0
    %592 = vmatpush1.xpose.msra.mxu0 %v583
    %593 = vmatprep.subr.mxu0 0.0
    %594 = vmatpush1.xpose.msra.mxu0 0.0
    %595 = vmatprep.subr.mxu0 0.0
    %596 = vmatpush1.xpose.msra.mxu0 0.0
    %597 = vmatprep.subr.mxu0 0.0
    %598 = vmatpush1.xpose.msra.mxu0 0.0
    %599 = vmatprep.subr.mxu0 0.0
    %600 = vmatpush1.xpose.msra.mxu0 0.0
    %601 = vmatprep.subr.mxu0 0.0
    %602 = vmatpush1.xpose.msra.mxu0 0.0
    %603 = vmatprep.subr.mxu0 0.0
    %604 = vmatpush1.xpose.msra.mxu0 0.0
    %605 = vmatprep.subr.mxu0 0.0
    %606 = vmatpush1.xpose.msra.mxu0 0.0
    %607 = vmatprep.subr.mxu0 0.0
    %608 = vmatpush1.xpose.msra.mxu0 0.0
    %609 = vmatprep.subr.mxu0 0.0
    %610 = vmatpush1.xpose.msra.mxu0 0.0
    %611 = vmatprep.subr.mxu0 0.0
    %612 = vmatpush1.xpose.msra.mxu0 0.0
    %613 = vmatprep.subr.mxu0 0.0
    %614 = vmatpush1.xpose.msra.mxu0 0.0
    %615 = vmatprep.subr.mxu0 0.0
    %616 = vmatpush1.xpose.msra.mxu0 0.0
    %617 = vmatprep.subr.mxu0 0.0
    %618 = vmatpush1.xpose.msra.mxu0 0.0
    %619 = vmatprep.subr.mxu0 0.0
    %620 = vmatpush1.xpose.msra.mxu0 0.0
    %621 = vmatprep.subr.mxu0 0.0
    %622 = vmatpush1.xpose.msra.mxu0 0.0
    %623 = vmatprep.subr.mxu0 0.0
    %624 = vmatpush1.xpose.msra.mxu0 0.0
    %625 = vmatprep.subr.mxu0 0.0
    %626 = vmatpush1.xpose.msra.mxu0 0.0
    %627 = vmatprep.subr.mxu0 0.0
    %628 = vmatpush1.xpose.msra.mxu0 0.0
    %629 = vmatprep.subr.mxu0 0.0
    %630 = vmatpush1.xpose.msra.mxu0 0.0
    %631 = vmatprep.subr.mxu0 0.0
    %632 = vmatpush1.xpose.msra.mxu0 0.0
    %633 = vmatprep.subr.mxu0 0.0
    %634 = vmatpush1.xpose.msra.mxu0 0.0
    %635 = vmatprep.subr.mxu0 0.0
    %636 = vmatpush1.xpose.msra.mxu0 0.0
    %637 = vmatprep.subr.mxu0 0.0
    %638 = vmatpush1.xpose.msra.mxu0 0.0
    %639 = vmatprep.subr.mxu0 0.0
    %640 = vmatpush1.xpose.msra.mxu0 0.0
    %641 = vmatprep.subr.mxu0 0.0
    %642 = vmatpush1.xpose.msra.mxu0 0.0
    %643 = vmatprep.subr.mxu0 0.0
    %644 = vmatpush1.xpose.msra.mxu0 0.0
    %645 = vmatprep.subr.mxu0 0.0
    %646 = vmatpush1.xpose.msra.mxu0 0.0
    %647 = vmatprep.subr.mxu0 0.0
    %648 = vmatpush1.xpose.msra.mxu0 0.0
    %649 = vmatprep.subr.mxu0 0.0
    %650 = vmatpush1.xpose.msra.mxu0 0.0
    %651 = vmatprep.subr.mxu0 0.0
    %652 = vmatpush1.xpose.msra.mxu0 0.0
    %653 = vmatprep.mubr.f32.mxu0 0.0
    %654 = vmatmul.mubr.f32.gmra.mrb[0].mxu0 %v581
    %v655 = vpop.f32.mrb[0].mxu0
    %v656 = vadd.f32 %v588, %v655
    %v657 = vpop.f32.mrb[0].mxu0
    %658 = vdwg.mxu0
    %659 = vst [vmem:[%s4] sm:$0xff] 0.0
    %vm660 = vcmask 130048
    %661 = vst.msk [vmem:[%s4] sm:$0xff] %vm660, %v656
    %v662 = vld [vmem:[%s3 + $0x21] sm:$0xff]
    %v663 = vmul.f32 %v656, 0.5
    %v664 = vmul.f32 %v663, 1.442695
    %v665 = vpow.pop %v664
    %667 = vrot.lane.b32.xlu0 %v662, 8
    %v668 = vpop.permute.xlu0 %667
    %v670 = vmul.f32 %v665, %v668
    %672 = vrot.lane.b32.xlu0 %v670, 120
    %v673 = vpop.permute.xlu0 %672
    %v675 = vadd.f32 %v656, %v673
    %v676 = vld [vmem:[%s3 + $0x1a] sm:$0x1]
    %v677 = vlaneseq
    %v678 = vshrl.u32 %v677, 7
    %v679 = vsub.s32 0, %v678
    %v680 = vrot.slane %v676, %v679
    %v681 = vld [vmem:[%s3 + $0x10] sm:$0x1]
    %683 = vset.pattern.permute.xlu0 0
    %684 = vperm.xlu0 %683, %v675
    %v685 = vpop.permute.xlu0 %684
    %v687 = vlaneseq
    %v688 = vshrl.u32 %v687, 7
    %v689 = vsub.s32 0, %v688
    %v690 = vrot.slane %v681, %v689
    %v691 = vmul.f32 %v685, %v690
    %v692 = vadd.f32 %v680, %v691
    %v693 = vld [vmem:[%s3 + $0x11] sm:$0x1]
    %694 = vset.pattern.permute.xlu0 1
    %695 = vperm.xlu0 %694, %v675
    %v696 = vpop.permute.xlu0 %695
    %v698 = vlaneseq
    %v699 = vshrl.u32 %v698, 7
    %v700 = vsub.s32 0, %v699
    %v701 = vrot.slane %v693, %v700
    %v702 = vmul.f32 %v696, %v701
    %v703 = vadd.f32 %v692, %v702
    %v704 = vld [vmem:[%s3 + $0x12] sm:$0x1]
    %705 = vset.pattern.permute.xlu0 2
    %706 = vperm.xlu0 %705, %v675
    %v707 = vpop.permute.xlu0 %706
    %v709 = vlaneseq
    %v710 = vshrl.u32 %v709, 7
    %v711 = vsub.s32 0, %v710
    %v712 = vrot.slane %v704, %v711
    %v713 = vmul.f32 %v707, %v712
    %v714 = vadd.f32 %v703, %v713
    %v715 = vld [vmem:[%s3 + $0x13] sm:$0x1]
    %716 = vset.pattern.permute.xlu0 3
    %717 = vperm.xlu0 %716, %v675
    %v718 = vpop.permute.xlu0 %717
    %v720 = vlaneseq
    %v721 = vshrl.u32 %v720, 7
    %v722 = vsub.s32 0, %v721
    %v723 = vrot.slane %v715, %v722
    %v724 = vmul.f32 %v718, %v723
    %v725 = vadd.f32 %v714, %v724
    %v726 = vld [vmem:[%s3 + $0x14] sm:$0x1]
    %727 = vset.pattern.permute.xlu0 4
    %728 = vperm.xlu0 %727, %v675
    %v729 = vpop.permute.xlu0 %728
    %v731 = vlaneseq
    %v732 = vshrl.u32 %v731, 7
    %v733 = vsub.s32 0, %v732
    %v734 = vrot.slane %v726, %v733
    %v735 = vmul.f32 %v729, %v734
    %v736 = vadd.f32 %v725, %v735
    %v737 = vld [vmem:[%s3 + $0x15] sm:$0x1]
    %738 = vset.pattern.permute.xlu0 5
    %739 = vperm.xlu0 %738, %v675
    %v740 = vpop.permute.xlu0 %739
    %v742 = vlaneseq
    %v743 = vshrl.u32 %v742, 7
    %v744 = vsub.s32 0, %v743
    %v745 = vrot.slane %v737, %v744
    %v746 = vmul.f32 %v740, %v745
    %v747 = vadd.f32 %v736, %v746
    %v748 = vld [vmem:[%s3 + $0x16] sm:$0x1]
    %749 = vset.pattern.permute.xlu0 6
    %750 = vperm.xlu0 %749, %v675
    %v751 = vpop.permute.xlu0 %750
    %v753 = vlaneseq
    %v754 = vshrl.u32 %v753, 7
    %v755 = vsub.s32 0, %v754
    %v756 = vrot.slane %v748, %v755
    %v757 = vmul.f32 %v751, %v756
    %v758 = vadd.f32 %v747, %v757
    %v759 = vld [vmem:[%s3 + $0x17] sm:$0x1]
    %760 = vset.pattern.permute.xlu0 7
    %761 = vperm.xlu0 %760, %v675
    %v762 = vpop.permute.xlu0 %761
    %v764 = vlaneseq
    %v765 = vshrl.u32 %v764, 7
    %v766 = vsub.s32 0, %v765
    %v767 = vrot.slane %v759, %v766
    %v768 = vmul.f32 %v762, %v767
    %v769 = vadd.f32 %v758, %v768
    %v770 = vmax.f32 %v769, 0.0
    %v771 = vpack.c.bf16 %v770, %v770
    %v772 = vld [vmem:[#allocation4] sm:$0xff]
    %v773 = vld [vmem:[#allocation4 + $0x8] sm:$0xff]
    %v774 = vld [vmem:[#allocation4 + $0x10] sm:$0xff]
    %v775 = vld [vmem:[#allocation4 + $0x18] sm:$0xff]
    %v776 = vld [vmem:[#allocation4 + $0x20] sm:$0xff]
    %v777 = vld [vmem:[#allocation4 + $0x28] sm:$0xff]
    %v778 = vld [vmem:[#allocation4 + $0x30] sm:$0xff]
    %v779 = vld [vmem:[#allocation4 + $0x38] sm:$0xff]
    %v780 = vld [vmem:[#allocation4 + $0x40] sm:$0xff]
    %v781 = vld [vmem:[#allocation4 + $0x48] sm:$0xff]
    %v782 = vld [vmem:[#allocation4 + $0x50] sm:$0xff]
    %v783 = vld [vmem:[#allocation4 + $0x58] sm:$0xff]
    %v784 = vld [vmem:[#allocation4 + $0x60] sm:$0xff]
    %v785 = vld [vmem:[#allocation4 + $0x68] sm:$0xff]
    %v786 = vld [vmem:[#allocation4 + $0x70] sm:$0xff]
    %v787 = vld [vmem:[#allocation4 + $0x78] sm:$0xff]
    %v788 = vld [vmem:[#allocation4 + $0x80] sm:$0xff]
    %v789 = vld [vmem:[#allocation4 + $0x88] sm:$0xff]
    %v790 = vld [vmem:[#allocation4 + $0x90] sm:$0xff]
    %v791 = vld [vmem:[#allocation4 + $0x98] sm:$0xff]
    %v792 = vld [vmem:[#allocation4 + $0xa0] sm:$0xff]
    %v793 = vld [vmem:[#allocation4 + $0xa8] sm:$0xff]
    %v794 = vld [vmem:[#allocation4 + $0xb0] sm:$0xff]
    %v795 = vld [vmem:[#allocation4 + $0xb8] sm:$0xff]
    %v796 = vld [vmem:[#allocation4 + $0xc0] sm:$0xff]
    %v797 = vld [vmem:[#allocation4 + $0xc8] sm:$0xff]
    %v798 = vld [vmem:[#allocation4 + $0xd0] sm:$0xff]
    %v799 = vld [vmem:[#allocation4 + $0xd8] sm:$0xff]
    %v800 = vld [vmem:[#allocation4 + $0xe0] sm:$0xff]
    %v801 = vld [vmem:[#allocation4 + $0xe8] sm:$0xff]
    %v802 = vld [vmem:[#allocation4 + $0xf0] sm:$0xff]
    %v803 = vld [vmem:[#allocation4 + $0xf8] sm:$0xff]
    %v804 = vld [vmem:[#allocation4 + $0x100] sm:$0xff]
    %v805 = vld [vmem:[#allocation4 + $0x108] sm:$0xff]
    %v806 = vld [vmem:[#allocation4 + $0x110] sm:$0xff]
    %v807 = vld [vmem:[#allocation4 + $0x118] sm:$0xff]
    %v808 = vld [vmem:[#allocation4 + $0x120] sm:$0xff]
    %v809 = vld [vmem:[#allocation4 + $0x128] sm:$0xff]
    %v810 = vld [vmem:[#allocation4 + $0x130] sm:$0xff]
    %v811 = vld [vmem:[#allocation4 + $0x138] sm:$0xff]
    %v812 = vld [vmem:[#allocation4 + $0x140] sm:$0xff]
    %v813 = vld [vmem:[#allocation4 + $0x148] sm:$0xff]
    %v814 = vld [vmem:[#allocation4 + $0x150] sm:$0xff]
    %v815 = vld [vmem:[#allocation4 + $0x158] sm:$0xff]
    %v816 = vld [vmem:[#allocation4 + $0x160] sm:$0xff]
    %v817 = vld [vmem:[#allocation4 + $0x168] sm:$0xff]
    %v818 = vld [vmem:[#allocation4 + $0x170] sm:$0xff]
    %v819 = vld [vmem:[#allocation4 + $0x178] sm:$0xff]
    %v868 = vunpack.c.l.b16 %v772
    %v869 = vunpack.c.h.b16 %v772
    %v870 = vunpack.c.l.b16 %v773
    %v871 = vunpack.c.h.b16 %v773
    %v872 = vunpack.c.l.b16 %v774
    %v873 = vunpack.c.h.b16 %v774
    %v874 = vunpack.c.l.b16 %v775
    %v875 = vunpack.c.h.b16 %v775
    %v876 = vunpack.c.l.b16 %v776
    %v877 = vunpack.c.h.b16 %v776
    %v878 = vunpack.c.l.b16 %v777
    %v879 = vunpack.c.h.b16 %v777
    %v880 = vunpack.c.l.b16 %v778
    %v881 = vunpack.c.h.b16 %v778
    %v882 = vunpack.c.l.b16 %v779
    %v883 = vunpack.c.h.b16 %v779
    %v884 = vunpack.c.l.b16 %v780
    %v885 = vunpack.c.h.b16 %v780
    %v886 = vunpack.c.l.b16 %v781
    %v887 = vunpack.c.h.b16 %v781
    %v888 = vunpack.c.l.b16 %v782
    %v889 = vunpack.c.h.b16 %v782
    %v890 = vunpack.c.l.b16 %v783
    %v891 = vunpack.c.h.b16 %v783
    %v892 = vunpack.c.l.b16 %v784
    %v893 = vunpack.c.h.b16 %v784
    %v894 = vunpack.c.l.b16 %v785
    %v895 = vunpack.c.h.b16 %v785
    %v896 = vunpack.c.l.b16 %v786
    %v897 = vunpack.c.h.b16 %v786
    %v898 = vunpack.c.l.b16 %v787
    %v899 = vunpack.c.h.b16 %v787
    %v900 = vunpack.c.l.b16 %v788
    %v901 = vunpack.c.h.b16 %v788
    %v902 = vunpack.c.l.b16 %v789
    %v903 = vunpack.c.h.b16 %v789
    %v904 = vunpack.c.l.b16 %v790
    %v905 = vunpack.c.h.b16 %v790
    %v906 = vunpack.c.l.b16 %v791
    %v907 = vunpack.c.h.b16 %v791
    %v908 = vunpack.c.l.b16 %v792
    %v909 = vunpack.c.h.b16 %v792
    %v910 = vunpack.c.l.b16 %v793
    %v911 = vunpack.c.h.b16 %v793
    %v912 = vunpack.c.l.b16 %v794
    %v913 = vunpack.c.h.b16 %v794
    %v914 = vunpack.c.l.b16 %v795
    %v915 = vunpack.c.h.b16 %v795
    %v916 = vunpack.c.l.b16 %v796
    %v917 = vunpack.c.h.b16 %v796
    %v918 = vunpack.c.l.b16 %v797
    %v919 = vunpack.c.h.b16 %v797
    %v920 = vunpack.c.l.b16 %v798
    %v921 = vunpack.c.h.b16 %v798
    %v922 = vunpack.c.l.b16 %v799
    %v923 = vunpack.c.h.b16 %v799
    %v924 = vunpack.c.l.b16 %v800
    %v925 = vunpack.c.h.b16 %v800
    %v926 = vunpack.c.l.b16 %v801
    %v927 = vunpack.c.h.b16 %v801
    %v928 = vunpack.c.l.b16 %v802
    %v929 = vunpack.c.h.b16 %v802
    %v930 = vunpack.c.l.b16 %v803
    %v931 = vunpack.c.h.b16 %v803
    %v932 = vunpack.c.l.b16 %v804
    %v933 = vunpack.c.h.b16 %v804
    %v934 = vunpack.c.l.b16 %v805
    %v935 = vunpack.c.h.b16 %v805
    %v936 = vunpack.c.l.b16 %v806
    %v937 = vunpack.c.h.b16 %v806
    %v938 = vunpack.c.l.b16 %v807
    %v939 = vunpack.c.h.b16 %v807
    %v940 = vunpack.c.l.b16 %v808
    %v941 = vunpack.c.h.b16 %v808
    %v942 = vunpack.c.l.b16 %v809
    %v943 = vunpack.c.h.b16 %v809
    %v944 = vunpack.c.l.b16 %v810
    %v945 = vunpack.c.h.b16 %v810
    %v946 = vunpack.c.l.b16 %v811
    %v947 = vunpack.c.h.b16 %v811
    %v948 = vunpack.c.l.b16 %v812
    %v949 = vunpack.c.h.b16 %v812
    %v950 = vunpack.c.l.b16 %v813
    %v951 = vunpack.c.h.b16 %v813
    %v952 = vunpack.c.l.b16 %v814
    %v953 = vunpack.c.h.b16 %v814
    %v954 = vunpack.c.l.b16 %v815
    %v955 = vunpack.c.h.b16 %v815
    %v956 = vunpack.c.l.b16 %v816
    %v957 = vunpack.c.h.b16 %v816
    %v958 = vunpack.c.l.b16 %v817
    %v959 = vunpack.c.h.b16 %v817
    %v960 = vunpack.c.l.b16 %v818
    %v961 = vunpack.c.h.b16 %v818
    %v962 = vunpack.c.l.b16 %v819
    %v963 = vunpack.c.h.b16 %v819
    %v964 = vpack.c.b16 %v874, %v868
    %v965 = vpack.c.b16 %v875, %v869
    %v966 = vpack.c.b16 %v876, %v870
    %v967 = vpack.c.b16 %v877, %v871
    %v968 = vpack.c.b16 %v878, %v872
    %v969 = vpack.c.b16 %v879, %v873
    %v970 = vpack.c.b16 %v886, %v880
    %v971 = vpack.c.b16 %v887, %v881
    %v972 = vpack.c.b16 %v888, %v882
    %v973 = vpack.c.b16 %v889, %v883
    %v974 = vpack.c.b16 %v890, %v884
    %v975 = vpack.c.b16 %v891, %v885
    %v976 = vpack.c.b16 %v898, %v892
    %v977 = vpack.c.b16 %v899, %v893
    %v978 = vpack.c.b16 %v900, %v894
    %v979 = vpack.c.b16 %v901, %v895
    %v980 = vpack.c.b16 %v902, %v896
    %v981 = vpack.c.b16 %v903, %v897
    %v982 = vpack.c.b16 %v910, %v904
    %v983 = vpack.c.b16 %v911, %v905
    %v984 = vpack.c.b16 %v912, %v906
    %v985 = vpack.c.b16 %v913, %v907
    %v986 = vpack.c.b16 %v914, %v908
    %v987 = vpack.c.b16 %v915, %v909
    %v988 = vpack.c.b16 %v922, %v916
    %v989 = vpack.c.b16 %v923, %v917
    %v990 = vpack.c.b16 %v924, %v918
    %v991 = vpack.c.b16 %v925, %v919
    %v992 = vpack.c.b16 %v926, %v920
    %v993 = vpack.c.b16 %v927, %v921
    %v994 = vpack.c.b16 %v934, %v928
    %v995 = vpack.c.b16 %v935, %v929
    %v996 = vpack.c.b16 %v936, %v930
    %v997 = vpack.c.b16 %v937, %v931
    %v998 = vpack.c.b16 %v938, %v932
    %v999 = vpack.c.b16 %v939, %v933
    %v1000 = vpack.c.b16 %v946, %v940
    %v1001 = vpack.c.b16 %v947, %v941
    %v1002 = vpack.c.b16 %v948, %v942
    %v1003 = vpack.c.b16 %v949, %v943
    %v1004 = vpack.c.b16 %v950, %v944
    %v1005 = vpack.c.b16 %v951, %v945
    %v1006 = vpack.c.b16 %v958, %v952
    %v1007 = vpack.c.b16 %v959, %v953
    %v1008 = vpack.c.b16 %v960, %v954
    %v1009 = vpack.c.b16 %v961, %v955
    %v1010 = vpack.c.b16 %v962, %v956
    %v1011 = vpack.c.b16 %v963, %v957
    %1060 = vmatprep.subr.bf16.mxu0 %v965
    %1061 = vmatpush1.bf16.msra.mxu0 %v964
    %1062 = vmatprep.subr.bf16.mxu0 %v971
    %1063 = vmatpush1.bf16.msra.mxu0 %v970
    %1064 = vmatprep.subr.bf16.mxu0 %v977
    %1065 = vmatpush1.bf16.msra.mxu0 %v976
    %1066 = vmatprep.subr.bf16.mxu0 %v983
    %1067 = vmatpush1.bf16.msra.mxu0 %v982
    %1068 = vmatprep.subr.bf16.mxu0 %v989
    %1069 = vmatpush1.bf16.msra.mxu0 %v988
    %1070 = vmatprep.subr.bf16.mxu0 %v995
    %1071 = vmatpush1.bf16.msra.mxu0 %v994
    %1072 = vmatprep.subr.bf16.mxu0 %v1001
    %1073 = vmatpush1.bf16.msra.mxu0 %v1000
    %1074 = vmatprep.subr.bf16.mxu0 %v1007
    %1075 = vmatpush1.bf16.msra.mxu0 %v1006
    %1076 = vmatprep.subr.bf16.mxu0 0
    %1077 = vmatpush1.bf16.msra.mxu0 0
    %1078 = vmatprep.subr.bf16.mxu0 0
    %1079 = vmatpush1.bf16.msra.mxu0 0
    %1080 = vmatprep.subr.bf16.mxu0 0
    %1081 = vmatpush1.bf16.msra.mxu0 0
    %1082 = vmatprep.subr.bf16.mxu0 0
    %1083 = vmatpush1.bf16.msra.mxu0 0
    %1084 = vmatprep.subr.bf16.mxu0 0
    %1085 = vmatpush1.bf16.msra.mxu0 0
    %1086 = vmatprep.subr.bf16.mxu0 0
    %1087 = vmatpush1.bf16.msra.mxu0 0
    %1088 = vmatprep.subr.bf16.mxu0 0
    %1089 = vmatpush1.bf16.msra.mxu0 0
    %1090 = vmatprep.subr.bf16.mxu0 0
    %1091 = vmatpush1.bf16.msra.mxu0 0
    %1092 = vmatprep.mubr.bf16.mxu0 0
    %1093 = vmatmul.mubr.bf16.gmra.mrb[0].mxu0 %v771
    %v1094 = vpop.f32.mrb[0].mxu0
    %v1095 = vadd.f32 0.0, %v1094
    %v1096 = vpop.f32.mrb[0].mxu0
    %v1097 = vadd.f32 0.0, %v1096
    %v1098 = vpop.f32.mrb[0].mxu0
    %v1099 = vpop.f32.mrb[0].mxu0
    %1100 = vdwg.mxu0
    %1101 = vmatprep.subr.bf16.mxu0 %v967
    %1102 = vmatpush1.bf16.msra.mxu0 %v966
    %1103 = vmatprep.subr.bf16.mxu0 %v973
    %1104 = vmatpush1.bf16.msra.mxu0 %v972
    %1105 = vmatprep.subr.bf16.mxu0 %v979
    %1106 = vmatpush1.bf16.msra.mxu0 %v978
    %1107 = vmatprep.subr.bf16.mxu0 %v985
    %1108 = vmatpush1.bf16.msra.mxu0 %v984
    %1109 = vmatprep.subr.bf16.mxu0 %v991
    %1110 = vmatpush1.bf16.msra.mxu0 %v990
    %1111 = vmatprep.subr.bf16.mxu0 %v997
    %1112 = vmatpush1.bf16.msra.mxu0 %v996
    %1113 = vmatprep.subr.bf16.mxu0 %v1003
    %1114 = vmatpush1.bf16.msra.mxu0 %v1002
    %1115 = vmatprep.subr.bf16.mxu0 %v1009
    %1116 = vmatpush1.bf16.msra.mxu0 %v1008
    %1117 = vmatprep.subr.bf16.mxu0 0
    %1118 = vmatpush1.bf16.msra.mxu0 0
    %1119 = vmatprep.subr.bf16.mxu0 0
    %1120 = vmatpush1.bf16.msra.mxu0 0
    %1121 = vmatprep.subr.bf16.mxu0 0
    %1122 = vmatpush1.bf16.msra.mxu0 0
    %1123 = vmatprep.subr.bf16.mxu0 0
    %1124 = vmatpush1.bf16.msra.mxu0 0
    %1125 = vmatprep.subr.bf16.mxu0 0
    %1126 = vmatpush1.bf16.msra.mxu0 0
    %1127 = vmatprep.subr.bf16.mxu0 0
    %1128 = vmatpush1.bf16.msra.mxu0 0
    %1129 = vmatprep.subr.bf16.mxu0 0
    %1130 = vmatpush1.bf16.msra.mxu0 0
    %1131 = vmatprep.subr.bf16.mxu0 0
    %1132 = vmatpush1.bf16.msra.mxu0 0
    %1133 = vmatprep.mubr.bf16.mxu0 0
    %1134 = vmatmul.mubr.bf16.gmra.mrb[0].mxu0 %v771
    %v1135 = vpop.f32.mrb[0].mxu0
    %v1136 = vadd.f32 0.0, %v1135
    %v1137 = vpop.f32.mrb[0].mxu0
    %v1138 = vadd.f32 0.0, %v1137
    %v1139 = vpop.f32.mrb[0].mxu0
    %v1140 = vpop.f32.mrb[0].mxu0
    %1141 = vdwg.mxu0
    %1142 = vmatprep.subr.bf16.mxu0 %v969
    %1143 = vmatpush1.bf16.msra.mxu0 %v968
    %1144 = vmatprep.subr.bf16.mxu0 %v975
    %1145 = vmatpush1.bf16.msra.mxu0 %v974
    %1146 = vmatprep.subr.bf16.mxu0 %v981
    %1147 = vmatpush1.bf16.msra.mxu0 %v980
    %1148 = vmatprep.subr.bf16.mxu0 %v987
    %1149 = vmatpush1.bf16.msra.mxu0 %v986
    %1150 = vmatprep.subr.bf16.mxu0 %v993
    %1151 = vmatpush1.bf16.msra.mxu0 %v992
    %1152 = vmatprep.subr.bf16.mxu0 %v999
    %1153 = vmatpush1.bf16.msra.mxu0 %v998
    %1154 = vmatprep.subr.bf16.mxu0 %v1005
    %1155 = vmatpush1.bf16.msra.mxu0 %v1004
    %1156 = vmatprep.subr.bf16.mxu0 %v1011
    %1157 = vmatpush1.bf16.msra.mxu0 %v1010
    %1158 = vmatprep.subr.bf16.mxu0 0
    %1159 = vmatpush1.bf16.msra.mxu0 0
    %1160 = vmatprep.subr.bf16.mxu0 0
    %1161 = vmatpush1.bf16.msra.mxu0 0
    %1162 = vmatprep.subr.bf16.mxu0 0
    %1163 = vmatpush1.bf16.msra.mxu0 0
    %1164 = vmatprep.subr.bf16.mxu0 0
    %1165 = vmatpush1.bf16.msra.mxu0 0
    %1166 = vmatprep.subr.bf16.mxu0 0
    %1167 = vmatpush1.bf16.msra.mxu0 0
    %1168 = vmatprep.subr.bf16.mxu0 0
    %1169 = vmatpush1.bf16.msra.mxu0 0
    %1170 = vmatprep.subr.bf16.mxu0 0
    %1171 = vmatpush1.bf16.msra.mxu0 0
    %1172 = vmatprep.subr.bf16.mxu0 0
    %1173 = vmatpush1.bf16.msra.mxu0 0
    %1174 = vmatprep.mubr.bf16.mxu0 0
    %1175 = vmatmul.mubr.bf16.gmra.mrb[0].mxu0 %v771
    %v1176 = vpop.f32.mrb[0].mxu0
    %v1177 = vadd.f32 0.0, %v1176
    %v1178 = vpop.f32.mrb[0].mxu0
    %v1179 = vadd.f32 0.0, %v1178
    %v1180 = vpop.f32.mrb[0].mxu0
    %v1181 = vpop.f32.mrb[0].mxu0
    %1182 = vdwg.mxu0
    %v1183 = vld [vmem:[%s3 + $0x1b] sm:$0x1]
    %v1184 = vlaneseq
    %v1185 = vshrl.u32 %v1184, 7
    %v1186 = vsub.s32 0, %v1185
    %v1187 = vrot.slane %v1183, %v1186
    %v1188 = vadd.f32 %v1095, %v1187
    %1189 = vst [vmem:[%s5] sm:$0xff] %v1188
    %v1190 = vld [vmem:[%s3 + $0x1c] sm:$0x1]
    %v1191 = vlaneseq
    %v1192 = vshrl.u32 %v1191, 7
    %v1193 = vsub.s32 0, %v1192
    %v1194 = vrot.slane %v1190, %v1193
    %v1195 = vadd.f32 %v1097, %v1194
    %1196 = vst [vmem:[%s5 + $0x8] sm:$0xff] %v1195
    %v1197 = vld [vmem:[%s3 + $0x1d] sm:$0x1]
    %v1198 = vlaneseq
    %v1199 = vshrl.u32 %v1198, 7
    %v1200 = vsub.s32 0, %v1199
    %v1201 = vrot.slane %v1197, %v1200
    %v1202 = vadd.f32 %v1136, %v1201
    %1203 = vst [vmem:[%s5 + $0x10] sm:$0xff] %v1202
    %v1204 = vld [vmem:[%s3 + $0x1e] sm:$0x1]
    %v1205 = vlaneseq
    %v1206 = vshrl.u32 %v1205, 7
    %v1207 = vsub.s32 0, %v1206
    %v1208 = vrot.slane %v1204, %v1207
    %v1209 = vadd.f32 %v1138, %v1208
    %1210 = vst [vmem:[%s5 + $0x18] sm:$0xff] %v1209
    %v1211 = vld [vmem:[%s3 + $0x1f] sm:$0x1]
    %v1212 = vlaneseq
    %v1213 = vshrl.u32 %v1212, 7
    %v1214 = vsub.s32 0, %v1213
    %v1215 = vrot.slane %v1211, %v1214
    %v1216 = vadd.f32 %v1177, %v1215
    %1217 = vst [vmem:[%s5 + $0x20] sm:$0xff] %v1216
    %v1218 = vld [vmem:[%s3 + $0x20] sm:$0x1]
    %v1219 = vlaneseq
    %v1220 = vshrl.u32 %v1219, 7
    %v1221 = vsub.s32 0, %v1220
    %v1222 = vrot.slane %v1218, %v1221
    %v1223 = vadd.f32 %v1179, %v1222
    %1224 = vst [vmem:[%s5 + $0x28] sm:$0xff] %v1223
    // Predicated region
    $region26: #{beta_vae_forward.1} parent=1 // pred_check
      _
    $region27: #{beta_vae_forward.1} parent=1 // pred_check_branch
      %1226 = sbr.rel (0) target = $region29
    $region28: #{beta_vae_forward.1} parent=1 // pred_region
      _
    $region29: #{beta_vae_forward.1} parent=1 // pred_fallthru
      _
    // Predicated region
    $region30: #{beta_vae_forward.1} parent=1 // pred_check
      _
    $region31: #{beta_vae_forward.1} parent=1 // pred_check_branch
      %1228 = sbr.rel (0) target = $region33
    $region32: #{beta_vae_forward.1} parent=1 // pred_region
      _
    $region33: #{beta_vae_forward.1} parent=1 // pred_fallthru
      _
    // Predicated region
    $region34: #{beta_vae_forward.1} parent=1 // pred_check
      _
    $region35: #{beta_vae_forward.1} parent=1 // pred_check_branch
      %1230 = sbr.rel (0) target = $region37
    $region36: #{beta_vae_forward.1} parent=1 // pred_region
      _
    $region37: #{beta_vae_forward.1} parent=1 // pred_fallthru
      _
    // Predicated region
    $region38: #{beta_vae_forward.1} parent=1 // pred_check
      _
    $region39: #{beta_vae_forward.1} parent=1 // pred_check_branch
      %1232 = sbr.rel (0) target = $region41
    $region40: #{beta_vae_forward.1} parent=1 // pred_region
      _
    $region41: #{beta_vae_forward.1} parent=1 // pred_fallthru
      _
    %1233 = vsyncpa [#allocation3], 1
    %1234 = vsyncpa [#allocation5], 1

</llo_original>
